<compile_context>
chip_gen: v7x
topology: tpu7x:2x2x1
jax: 0.10.0
libtpu: 0.0.40
codegen_flags: <defaults>
</compile_context>

<pallas_src>
import jax
import jax.numpy as jnp
from jax import lax
from jax.experimental import pallas as pl
from jax.experimental.pallas import tpu as pltpu

NEG_INF = float("-inf")


def _round_up(x, m):
    return ((x + m - 1) // m) * m


def _make_kernel(tn, M, M_acc, D_pad, keep_same_dim):
    """Build the scatter(add,max) [+ fused linear] kernel body."""

    def kernel(idx_ref, src_ref, *args):
        if keep_same_dim:
            wT_ref, b_ref, out_ref, add_acc, max_acc = args
        else:
            add_out_ref, max_out_ref, add_acc, max_acc = args

        ni = pl.program_id(0)

        # Init resident accumulators on the first row-tile.
        @pl.when(ni == 0)
        def _():
            add_acc[...] = jnp.zeros_like(add_acc)
            max_acc[...] = jnp.full_like(max_acc, NEG_INF)

        src_tile = src_ref[...].astype(jnp.float32)     # (tn, D_pad), cast once
        idx_tile = idx_ref[...]                         # (tn, 1) int32

        # ---- scatter-add: one-hot MXU matmul --------------------------------
        seg_ids = lax.broadcasted_iota(jnp.int32, (tn, M_acc), 1)
        one_hot = (seg_ids == idx_tile).astype(jnp.float32)       # (tn, M_acc)
        add_acc[...] += lax.dot_general(
            one_hot, src_tile,
            dimension_numbers=(((0,), (0,)), ((), ())),            # contract rows
            preferred_element_type=jnp.float32)                    # (M_acc, D_pad)

        # ---- scatter-max: masked full-vreg reduce per segment ---------------
        def seg_body(m, carry):
            mask = idx_tile == m                                   # (tn, 1)
            masked = jnp.where(mask, src_tile, NEG_INF)            # (tn, D_pad)
            seg_max = jnp.max(masked, axis=0, keepdims=True)       # (1, D_pad)
            max_acc[pl.ds(m, 1), :] = jnp.maximum(
                max_acc[pl.ds(m, 1), :], seg_max)
            return carry

        lax.fori_loop(0, M, seg_body, 0)

        # ---- finalize on the last row-tile ----------------------------------
        @pl.when(ni == pl.num_programs(0) - 1)
        def _():
            add = add_acc[...]
            mx = max_acc[...]
            # torch_scatter fills empty segments with 0 for 'max'.
            mx = jnp.where(mx == NEG_INF, jnp.zeros_like(mx), mx)
            if keep_same_dim:
                # concat([add, max]) @ W.T + b == add @ W.T[:D] + max @ W.T[D:] + b
                out = jnp.dot(add, wT_ref[:D_pad, :],
                              preferred_element_type=jnp.float32)
                out = out + jnp.dot(mx, wT_ref[D_pad:, :],
                                    preferred_element_type=jnp.float32)
                out_ref[...] = (out + b_ref[...]).astype(out_ref.dtype)
            else:
                add_out_ref[...] = add.astype(add_out_ref.dtype)
                max_out_ref[...] = mx.astype(max_out_ref.dtype)

    return kernel


def aggregator_forward(src, index, dim_size, weight=None, bias=None, *, tn=256):
    """Pallas version of Aggregator.forward (aggregators=['add', 'max'])."""
    N, D = src.shape
    M = int(dim_size)
    keep_same_dim = weight is not None

    # dtype-aware sublane packing: 8 rows for 4-byte, 16 for 2-byte, 32 for 1-byte.
    pack = 8 * (4 // jnp.dtype(src.dtype).itemsize)
    tn = max(pack, min(int(tn), _round_up(N, pack)))
    tn = _round_up(tn, pack)
    N_pad = _round_up(N, tn)

    D_pad = _round_up(max(D, 128), 128)      # lane-dense feature dim
    M_acc = _round_up(max(M, 8), 8)          # sublane-dense accumulator rows

    # Pad tail rows with zeros and a sentinel segment id (>= M_acc) that can
    # never match the one-hot iota or the per-segment mask -> zero contribution.
    src_p = jnp.pad(src, ((0, N_pad - N), (0, D_pad - D)))
    idx_p = jnp.pad(index.astype(jnp.int32), (0, N_pad - N),
                    constant_values=M_acc).reshape(N_pad, 1)

    grid = (N_pad // tn,)
    kernel = _make_kernel(tn, M, M_acc, D_pad, keep_same_dim)

    idx_spec = pl.BlockSpec((tn, 1), lambda ni: (ni, 0))
    src_spec = pl.BlockSpec((tn, D_pad), lambda ni: (ni, 0))

    if keep_same_dim:
        # W: [D, 2D] -> padded W.T: [2*D_pad, D_pad] (zero rows/cols elsewhere).
        wT = weight.T.astype(jnp.float32)                       # (2D, D)
        wT_p = jnp.zeros((2 * D_pad, D_pad), jnp.float32)
        wT_p = wT_p.at[:D, :D].set(wT[:D])
        wT_p = wT_p.at[D_pad:D_pad + D, :D].set(wT[D:])
        b_p = jnp.zeros((1, D_pad), jnp.float32).at[0, :D].set(
            bias.astype(jnp.float32))

        call_args = (idx_p, src_p, wT_p, b_p)
        in_specs = [idx_spec, src_spec,
                    pl.BlockSpec((2 * D_pad, D_pad), lambda ni: (0, 0)),
                    pl.BlockSpec((1, D_pad), lambda ni: (0, 0))]
        out_shape = jax.ShapeDtypeStruct((M_acc, D_pad), src.dtype)
        out_specs = pl.BlockSpec((M_acc, D_pad), lambda ni: (0, 0))
    else:
        call_args = (idx_p, src_p)
        in_specs = [idx_spec, src_spec]
        # Two lane-dense outputs; the wrapper slices and concatenates.
        out_shape = (jax.ShapeDtypeStruct((M_acc, D_pad), src.dtype),
                     jax.ShapeDtypeStruct((M_acc, D_pad), src.dtype))
        out_specs = (pl.BlockSpec((M_acc, D_pad), lambda ni: (0, 0)),
                     pl.BlockSpec((M_acc, D_pad), lambda ni: (0, 0)))

    grid_spec = pltpu.PrefetchScalarGridSpec(
        num_scalar_prefetch=0,
        grid=grid,
        in_specs=in_specs,
        out_specs=out_specs,
        scratch_shapes=[pltpu.VMEM((M_acc, D_pad), jnp.float32),   # add acc
                        pltpu.VMEM((M_acc, D_pad), jnp.float32)],  # max acc
    )

    out = pl.pallas_call(
        kernel,
        out_shape=out_shape,
        grid_spec=grid_spec,
        compiler_params=pltpu.CompilerParams(
            dimension_semantics=("arbitrary",)),
    )(*call_args)

    if keep_same_dim:
        return out[:M, :D]
    add_o, max_o = out
    return jnp.concatenate([add_o[:M, :D], max_o[:M, :D]], axis=-1)


def _reference(src, index, dim_size, weight=None, bias=None):
    add = jax.ops.segment_sum(src, index, num_segments=dim_size)
    mx = jax.ops.segment_max(src, index, num_segments=dim_size)
    mx = jnp.where(jnp.isneginf(mx), 0.0, mx)   # empty segments -> 0
    out = jnp.concatenate([add, mx], axis=-1)
    if weight is not None:
        out = out @ weight.T + bias
    return out


if __name__ == "__main__":
    key = jax.random.PRNGKey(0)
    k_src, k_idx, k_w, k_b, k_src2, k_idx2 = jax.random.split(key, 6)

    N, D = 16, 32          # N scattered rows, feature dim D
    dim_size = 6           # number of output segments (segment 5 may be empty)

    src = jax.random.normal(k_src, (N, D), dtype=jnp.float32)
    index = jax.random.randint(k_idx, (N,), 0, 5, dtype=jnp.int32)

    # Deterministic Linear(2D -> D) parameters (PyTorch-style uniform bounds).
    fan_in = 2 * D
    bound = 1.0 / (fan_in ** 0.5)
    weight = jax.random.uniform(k_w, (D, 2 * D), jnp.float32, -bound, bound)
    bias = jax.random.uniform(k_b, (D,), jnp.float32, -bound, bound)

    # keep_same_dim=False path: [dim_size, 2D]
    out_cat = jax.block_until_ready(aggregator_forward(src, index, dim_size))
    ref_cat = _reference(src, index, dim_size)
    assert out_cat.shape == (dim_size, 2 * D)
    assert jnp.allclose(out_cat, ref_cat, atol=1e-5, rtol=1e-5)

    # keep_same_dim=True path: [dim_size, D]
    out_lin = jax.block_until_ready(
        aggregator_forward(src, index, dim_size, weight, bias))
    ref_lin = _reference(src, index, dim_size, weight, bias)
    assert out_lin.shape == (dim_size, D)
    assert jnp.allclose(out_lin, ref_lin, atol=1e-4, rtol=1e-4)

    # Multi-tile grid case (exercises accumulation across grid steps).
    N2, M2 = 384, 6
    src2 = jax.random.normal(k_src2, (N2, D), dtype=jnp.float32)
    index2 = jax.random.randint(k_idx2, (N2,), 0, M2 - 1, dtype=jnp.int32)
    out2 = jax.block_until_ready(aggregator_forward(src2, index2, M2, tn=256))
    ref2 = _reference(src2, index2, M2)
    assert out2.shape == (M2, 2 * D)
    assert jnp.allclose(out2, ref2, atol=1e-4, rtol=1e-4)
    out2l = jax.block_until_ready(
        aggregator_forward(src2, index2, M2, weight, bias, tn=256))
    ref2l = _reference(src2, index2, M2, weight, bias)
    assert jnp.allclose(out2l, ref2l, atol=1e-4, rtol=1e-4)

    print("KERNEL_OK")
</pallas_src>

<mosaic_0001>
module attributes {stable_mosaic.version = 11 : i64} {
  func.func @kernel(%arg0: i32, %arg1: memref<16x1xi32, #tpu.memory_space<vmem>>, %arg2: memref<16x128xf32, #tpu.memory_space<vmem>>, %arg3: memref<8x128xf32, #tpu.memory_space<vmem>>, %arg4: memref<8x128xf32, #tpu.memory_space<vmem>>, %arg5: memref<8x128xf32, #tpu.memory_space<vmem>>, %arg6: memref<8x128xf32, #tpu.memory_space<vmem>>) attributes {dimension_semantics = [#tpu.dimension_semantics<arbitrary>], iteration_bounds = array<i64: 1>, scalar_prefetch = 0 : i64, scratch_operands = 2 : i64, tpu.core_type = #tpu.core_type<tc>, window_params = [{transform_indices = @transform_0, window_bounds = array<i64: 16, 1>}, {transform_indices = @transform_1, window_bounds = array<i64: 16, 128>}, {pipeline_mode = #tpu.pipeline_mode<synchronous>, transform_indices = @transform_2, window_bounds = array<i64: 8, 128>}, {pipeline_mode = #tpu.pipeline_mode<synchronous>, transform_indices = @transform_3, window_bounds = array<i64: 8, 128>}]} {
    %c0_i32 = arith.constant 0 : i32
    %0 = arith.cmpi eq, %arg0, %c0_i32 : i32
    %1 = arith.extui %0 : i1 to i32
    %c0_i32_0 = arith.constant 0 : i32
    %2 = arith.cmpi ne, %1, %c0_i32_0 : i32
    scf.if %2 {
      %cst_12 = arith.constant 0.000000e+00 : f32
      %18 = vector.broadcast %cst_12 : f32 to vector<8x128xf32>
      %c0_13 = arith.constant 0 : index
      %c0_14 = arith.constant 0 : index
      %19 = vector.load %arg5[%c0_13, %c0_14] : memref<8x128xf32, #tpu.memory_space<vmem>>, vector<8x128xf32>
      tpu.vector_store %arg5[%c0_13, %c0_14], %18 {strides = array<i32>} : memref<8x128xf32, #tpu.memory_space<vmem>>, vector<8x128xf32>,
      %cst_15 = arith.constant 0xFF800000 : f32
      %20 = vector.broadcast %cst_15 : f32 to vector<8x128xf32>
      %c0_16 = arith.constant 0 : index
      %c0_17 = arith.constant 0 : index
      %21 = vector.load %arg6[%c0_16, %c0_17] : memref<8x128xf32, #tpu.memory_space<vmem>>, vector<8x128xf32>
      tpu.vector_store %arg6[%c0_16, %c0_17], %20 {strides = array<i32>} : memref<8x128xf32, #tpu.memory_space<vmem>>, vector<8x128xf32>,
    } else {
    }
    %c0 = arith.constant 0 : index
    %c0_1 = arith.constant 0 : index
    %3 = vector.load %arg2[%c0, %c0_1] : memref<16x128xf32, #tpu.memory_space<vmem>>, vector<16x128xf32>
    %c0_2 = arith.constant 0 : index
    %c0_3 = arith.constant 0 : index
    %4 = vector.load %arg1[%c0_2, %c0_3] : memref<16x1xi32, #tpu.memory_space<vmem>>, vector<16x1xi32>
    %5 = tpu.iota {dimensions = array<i32: 1>} : vector<16x8xi32>
    %6 = vector.broadcast %4 : vector<16x1xi32> to vector<16x8xi32>
    %7 = arith.cmpi eq, %5, %6 : vector<16x8xi32>
    %8 = arith.extui %7 : vector<16x8xi1> to vector<16x8xi32>
    %9 = arith.sitofp %8 : vector<16x8xi32> to vector<16x8xf32>
    %c0_4 = arith.constant 0 : index
    %c0_5 = arith.constant 0 : index
    %10 = vector.load %arg5[%c0_4, %c0_5] : memref<8x128xf32, #tpu.memory_space<vmem>>, vector<8x128xf32>
    %cst = arith.constant dense<0.000000e+00> : vector<8x128xf32>
    %11 = tpu.matmul %9, %3, %cst {dimension_numbers = #tpu.dot_dimension_numbers<[0], [0], [1], [1], [0, 1, 1, 1], [], []>} : vector<16x8xf32>, vector<16x128xf32>, vector<8x128xf32> -> vector<8x128xf32>
    %12 = arith.addf %10, %11 : vector<8x128xf32>
    %c0_6 = arith.constant 0 : index
    %c0_7 = arith.constant 0 : index
    %13 = vector.load %arg5[%c0_6, %c0_7] : memref<8x128xf32, #tpu.memory_space<vmem>>, vector<8x128xf32>
    tpu.vector_store %arg5[%c0_6, %c0_7], %12 {strides = array<i32>} : memref<8x128xf32, #tpu.memory_space<vmem>>, vector<8x128xf32>,
    %c0_i32_8 = arith.constant 0 : i32
    %c6_i32 = arith.constant 6 : i32
    %14 = arith.addi %c0_i32_8, %c6_i32 : i32
    %c1_i32 = arith.constant 1 : i32
    scf.for %arg7 = %c0_i32_8 to %14 step %c1_i32  : i32 {
      %18 = vector.broadcast %arg7 : i32 to vector<16x1xi32>
      %19 = arith.cmpi eq, %4, %18 : vector<16x1xi32>
      %cst_12 = arith.constant 0xFF800000 : f32
      %20 = vector.shape_cast %19 : vector<16x1xi1> to vector<16x1xi1>
      %21 = vector.broadcast %20 : vector<16x1xi1> to vector<16x128xi1>
      %22 = vector.broadcast %cst_12 : f32 to vector<16x128xf32>
      %23 = arith.select %21, %3, %22 : vector<16x128xi1>, vector<16x128xf32>
      %cst_13 = arith.constant dense<0xFF800000> : vector<128xf32>
      %24 = vector.multi_reduction <maximumf>, %23, %cst_13 [0] : vector<16x128xf32> to vector<128xf32>
      %25 = vector.shape_cast %24 : vector<128xf32> to vector<1x128xf32>
      %26 = arith.index_cast %arg7 : i32 to index
      %c0_14 = arith.constant 0 : index
      %27 = vector.load %arg6[%26, %c0_14] : memref<8x128xf32, #tpu.memory_space<vmem>>, vector<1x128xf32>
      %28 = arith.maximumf %27, %25 : vector<1x128xf32>
      %29 = arith.index_cast %arg7 : i32 to index
      %c0_15 = arith.constant 0 : index
      %30 = vector.load %arg6[%29, %c0_15] : memref<8x128xf32, #tpu.memory_space<vmem>>, vector<1x128xf32>
      tpu.vector_store %arg6[%29, %c0_15], %28 {strides = array<i32>} : memref<8x128xf32, #tpu.memory_space<vmem>>, vector<1x128xf32>,
    }
    %c6_i32_9 = arith.constant 6 : i32
    %c0_i32_10 = arith.constant 0 : i32
    %15 = arith.cmpi eq, %arg0, %c0_i32_10 : i32
    %16 = arith.extui %15 : i1 to i32
    %c0_i32_11 = arith.constant 0 : i32
    %17 = arith.cmpi ne, %16, %c0_i32_11 : i32
    scf.if %17 {
      %c0_12 = arith.constant 0 : index
      %c0_13 = arith.constant 0 : index
      %18 = vector.load %arg5[%c0_12, %c0_13] : memref<8x128xf32, #tpu.memory_space<vmem>>, vector<8x128xf32>
      %c0_14 = arith.constant 0 : index
      %c0_15 = arith.constant 0 : index
      %19 = vector.load %arg6[%c0_14, %c0_15] : memref<8x128xf32, #tpu.memory_space<vmem>>, vector<8x128xf32>
      %cst_16 = arith.constant 0xFF800000 : f32
      %20 = vector.broadcast %cst_16 : f32 to vector<8x128xf32>
      %21 = arith.cmpf oeq, %19, %20 : vector<8x128xf32>
      %cst_17 = arith.constant 0.000000e+00 : f32
      %22 = vector.broadcast %cst_17 : f32 to vector<8x128xf32>
      %23 = arith.select %21, %22, %19 : vector<8x128xi1>, vector<8x128xf32>
      %c0_18 = arith.constant 0 : index
      %c0_19 = arith.constant 0 : index
      %24 = vector.load %arg3[%c0_18, %c0_19] : memref<8x128xf32, #tpu.memory_space<vmem>>, vector<8x128xf32>
      tpu.vector_store %arg3[%c0_18, %c0_19], %18 {strides = array<i32>} : memref<8x128xf32, #tpu.memory_space<vmem>>, vector<8x128xf32>,
      %c0_20 = arith.constant 0 : index
      %c0_21 = arith.constant 0 : index
      %25 = vector.load %arg4[%c0_20, %c0_21] : memref<8x128xf32, #tpu.memory_space<vmem>>, vector<8x128xf32>
      tpu.vector_store %arg4[%c0_20, %c0_21], %23 {strides = array<i32>} : memref<8x128xf32, #tpu.memory_space<vmem>>, vector<8x128xf32>,
    } else {
    }
    return
  }
  func.func @transform_0(%arg0: i32) -> (i32, i32) {
    %c0_i32 = arith.constant 0 : i32
    %c0_i32_0 = arith.constant 0 : i32
    return %arg0, %c0_i32 : i32, i32
  }
  func.func @transform_1(%arg0: i32) -> (i32, i32) {
    %c0_i32 = arith.constant 0 : i32
    %c0_i32_0 = arith.constant 0 : i32
    return %arg0, %c0_i32 : i32, i32
  }
  func.func @transform_2(%arg0: i32) -> (i32, i32) {
    %c0_i32 = arith.constant 0 : i32
    %c0_i32_0 = arith.constant 0 : i32
    %c0_i32_1 = arith.constant 0 : i32
    return %c0_i32, %c0_i32_0 : i32, i32
  }
  func.func @transform_3(%arg0: i32) -> (i32, i32) {
    %c0_i32 = arith.constant 0 : i32
    %c0_i32_0 = arith.constant 0 : i32
    %c0_i32_1 = arith.constant 0 : i32
    return %c0_i32, %c0_i32_0 : i32, i32
  }
}

</mosaic_0001>

<llo_original>
// kernel: tpu_custom_call.1
$region0: #{tpu_custom_call.1}
  #allocation0 [shape = 'u32[]', space=smem, size = 0x4, offset = 0x4, fixed_abs, tag = 'smem constant byte address 0x4 - core index']
  #allocation1 [shape = 'u32[144,128]{1,0:T(1,128)}', space=vmem, size = 0x12000, scoped, tag = 'internal scratch']
  #allocation2 [shape = 'f32[8,128]{1,0:T(8,128)}', space=vmem, size = 0x1000, scoped, tag = 'scratch operand']
  #allocation3 [shape = 'f32[8,128]{1,0:T(8,128)}', space=vmem, size = 0x1000, scoped, tag = 'scratch operand']
  %s0 = inlined_call_operand.vmem [shape: s32[16,1], index: 0, kind: input, shape index: {}]
  %s1 = inlined_call_operand.vmem [shape: f32[16,128], index: 1, kind: input, shape index: {}]
  %s2 = inlined_call_operand.hbm [shape: f32[8,128], index: 2, kind: output, shape index: {0}]
  %s3 = inlined_call_operand.hbm [shape: f32[8,128], index: 3, kind: output, shape index: {1}]
  %4 = xla_tuple %s2, %s3
  %s5 = sld [smem:[#allocation0]]
  $region41: #{tpu_custom_call.1} parent=0
    _
  %s7 = ssub.s32 1, %s5
  %s8 = scalar_select 0, %s7, %s5
  $region1: #{tpu_custom_call.1} parent=0
    #allocation4 [shape = 'u8[4096]{0}', space=vmem, size = 0x1000, scoped, tag = 'output window, operand 0, single buffered']
    #allocation5 [shape = 's32[1]{0}', space=sflag, size = 0x4, scoped, tag = 'scoped memory for tpu_custom_call.1']
    #allocation6 [shape = 'u8[4096]{0}', space=vmem, size = 0x1000, scoped, tag = 'output window, operand 1, single buffered']
    #allocation7 [shape = 's32[1]{0}', space=sflag, size = 0x4, scoped, tag = 'scoped memory for tpu_custom_call.1']
    %9 = vsyncpa [#allocation5], 0
    %10 = vsyncpa [#allocation7], 0
    // Predicated region
    $region2: #{tpu_custom_call.1} parent=1 // pred_check
      _
    $region3: #{tpu_custom_call.1} parent=1 // pred_check_branch
      %12 = sbr.rel (0) target = $region5
    $region4: #{tpu_custom_call.1} parent=1 // pred_region
      _
    $region5: #{tpu_custom_call.1} parent=1 // pred_fallthru
      _
    // Predicated region
    $region6: #{tpu_custom_call.1} parent=1 // pred_check
      _
    $region7: #{tpu_custom_call.1} parent=1 // pred_check_branch
      %14 = sbr.rel (0) target = $region9
    $region8: #{tpu_custom_call.1} parent=1 // pred_region
      _
    $region9: #{tpu_custom_call.1} parent=1 // pred_fallthru
      _
    %p15 = scmp.eq.s32.totalorder 0, 0
    // Predicated region
    $region10: #{tpu_custom_call.1} parent=1 // pred_check
      %p16 = pneg %p15
    $region11: #{tpu_custom_call.1} parent=1 // pred_check_branch
      %18 = sbr.rel (%p16) target = $region13
    $region12: #{tpu_custom_call.1} parent=1 // pred_region
      %19 = vst [vmem:[#allocation2] sm:$0xff] 0.0
      %20 = vst [vmem:[#allocation3] sm:$0xff] -inf
    $region13: #{tpu_custom_call.1} parent=1 // pred_fallthru
      _
    %v21 = vld [vmem:[%s1] sm:$0xff]
    %v22 = vld [vmem:[%s1 + $0x8] sm:$0xff]
    %v23 = vld [vmem:[%s0] sm:$0xff]
    %v24 = vld [vmem:[%s0 + $0x8] sm:$0xff]
    %v25 = vlaneseq
    %v26 = vand.u32 %v25, 127
    %27 = vset.pattern.permute.xlu0 0
    %28 = vperm.xlu0 %27, %v23
    %v29 = vpop.permute.xlu0 %28
    %30 = vset.pattern.permute.xlu0 0
    %31 = vperm.xlu0 %30, %v24
    %v32 = vpop.permute.xlu0 %31
    %vm33 = vcmp.eq.s32.totalorder %v26, %v29
    %vm34 = vcmp.eq.s32.totalorder %v26, %v32
    %v35 = vsel %vm33, 1, 0
    %v36 = vsel %vm34, 1, 0
    %v37 = vcvt.s32.f32 %v35
    %v38 = vcvt.s32.f32 %v36
    %v39 = vld [vmem:[#allocation2] sm:$0xff]
    %40 = vxpose.xlu0.b32.start [1/16] %v37, 128
    %41 = vxpose.xlu0.b32.cont [2/16] %v38, 128
    %42 = vxpose.xlu0.b32.cont [3/16] 0.0, 128
    %43 = vxpose.xlu0.b32.cont [4/16] 0.0, 128
    %44 = vxpose.xlu0.b32.cont [5/16] 0.0, 128
    %45 = vxpose.xlu0.b32.cont [6/16] 0.0, 128
    %46 = vxpose.xlu0.b32.cont [7/16] 0.0, 128
    %47 = vxpose.xlu0.b32.cont [8/16] 0.0, 128
    %48 = vxpose.xlu0.b32.cont [9/16] 0.0, 128
    %49 = vxpose.xlu0.b32.cont [10/16] 0.0, 128
    %50 = vxpose.xlu0.b32.cont [11/16] 0.0, 128
    %51 = vxpose.xlu0.b32.cont [12/16] 0.0, 128
    %52 = vxpose.xlu0.b32.cont [13/16] 0.0, 128
    %53 = vxpose.xlu0.b32.cont [14/16] 0.0, 128
    %54 = vxpose.xlu0.b32.cont [15/16] 0.0, 128
    %55 = vxpose.xlu0.b32.end [16/16] 0.0, 128
    %v56 = vpop.trf.xlu0
    %v57 = vpop.trf.xlu0
    %v58 = vpop.trf.xlu0
    %v59 = vpop.trf.xlu0
    %v60 = vpop.trf.xlu0
    %v61 = vpop.trf.xlu0
    %v62 = vpop.trf.xlu0
    %v63 = vpop.trf.xlu0
    %v64 = vpop.trf.xlu0
    %v65 = vpop.trf.xlu0
    %v66 = vpop.trf.xlu0
    %v67 = vpop.trf.xlu0
    %v68 = vpop.trf.xlu0
    %v69 = vpop.trf.xlu0
    %v70 = vpop.trf.xlu0
    %v71 = vpop.trf.xlu0
    %vm72 = vcmask 130048
    %v74 = vsel %vm72, %v56, 0
    %76 = vmatprep.subr.mxu0 0.0
    %77 = vmatpush1.msra.mxu0 %v21
    %78 = vmatprep.subr.mxu0 0.0
    %79 = vmatpush1.msra.mxu0 %v22
    %80 = vmatprep.subr.mxu0 0.0
    %81 = vmatpush1.msra.mxu0 0.0
    %82 = vmatprep.subr.mxu0 0.0
    %83 = vmatpush1.msra.mxu0 0.0
    %84 = vmatprep.subr.mxu0 0.0
    %85 = vmatpush1.msra.mxu0 0.0
    %86 = vmatprep.subr.mxu0 0.0
    %87 = vmatpush1.msra.mxu0 0.0
    %88 = vmatprep.subr.mxu0 0.0
    %89 = vmatpush1.msra.mxu0 0.0
    %90 = vmatprep.subr.mxu0 0.0
    %91 = vmatpush1.msra.mxu0 0.0
    %92 = vmatprep.subr.mxu0 0.0
    %93 = vmatpush1.msra.mxu0 0.0
    %94 = vmatprep.subr.mxu0 0.0
    %95 = vmatpush1.msra.mxu0 0.0
    %96 = vmatprep.subr.mxu0 0.0
    %97 = vmatpush1.msra.mxu0 0.0
    %98 = vmatprep.subr.mxu0 0.0
    %99 = vmatpush1.msra.mxu0 0.0
    %100 = vmatprep.subr.mxu0 0.0
    %101 = vmatpush1.msra.mxu0 0.0
    %102 = vmatprep.subr.mxu0 0.0
    %103 = vmatpush1.msra.mxu0 0.0
    %104 = vmatprep.subr.mxu0 0.0
    %105 = vmatpush1.msra.mxu0 0.0
    %106 = vmatprep.subr.mxu0 0.0
    %107 = vmatpush1.msra.mxu0 0.0
    %108 = vmatprep.subr.mxu0 0.0
    %109 = vmatpush1.msra.mxu0 0.0
    %110 = vmatprep.subr.mxu0 0.0
    %111 = vmatpush1.msra.mxu0 0.0
    %112 = vmatprep.subr.mxu0 0.0
    %113 = vmatpush1.msra.mxu0 0.0
    %114 = vmatprep.subr.mxu0 0.0
    %115 = vmatpush1.msra.mxu0 0.0
    %116 = vmatprep.subr.mxu0 0.0
    %117 = vmatpush1.msra.mxu0 0.0
    %118 = vmatprep.subr.mxu0 0.0
    %119 = vmatpush1.msra.mxu0 0.0
    %120 = vmatprep.subr.mxu0 0.0
    %121 = vmatpush1.msra.mxu0 0.0
    %122 = vmatprep.subr.mxu0 0.0
    %123 = vmatpush1.msra.mxu0 0.0
    %124 = vmatprep.subr.mxu0 0.0
    %125 = vmatpush1.msra.mxu0 0.0
    %126 = vmatprep.subr.mxu0 0.0
    %127 = vmatpush1.msra.mxu0 0.0
    %128 = vmatprep.subr.mxu0 0.0
    %129 = vmatpush1.msra.mxu0 0.0
    %130 = vmatprep.subr.mxu0 0.0
    %131 = vmatpush1.msra.mxu0 0.0
    %132 = vmatprep.subr.mxu0 0.0
    %133 = vmatpush1.msra.mxu0 0.0
    %134 = vmatprep.subr.mxu0 0.0
    %135 = vmatpush1.msra.mxu0 0.0
    %136 = vmatprep.subr.mxu0 0.0
    %137 = vmatpush1.msra.mxu0 0.0
    %138 = vmatprep.subr.mxu0 0.0
    %139 = vmatpush1.msra.mxu0 0.0
    %140 = vmatprep.mubr.f32.mxu0 0.0
    %141 = vmatmul.mubr.f32.gmra.mrb[0].mxu0 %v74
    %v142 = vpop.f32.mrb[0].mxu0
    %v143 = vadd.f32 0.0, %v142
    %v144 = vpop.f32.mrb[0].mxu0
    %145 = vdwg.mxu0
    %v146 = vadd.f32 %v39, %v143
    %147 = vst [vmem:[#allocation2] sm:$0xff] %v146
    loop: start=0, step=1, limit=6
    $region14: #{tpu_custom_call.1} parent=1 // loop_pre_header
      _
    $region15: #{tpu_custom_call.1} parent=1 // loop_header
      %s149 = sphi 0, %s153
      %p150 = scmp.ge.s32.totalorder %s149, 6
    $region16: #{tpu_custom_call.1} parent=1 // loop_header_branch
      %152 = sbr.rel (%p150) target = $region20
    $region17: #{tpu_custom_call.1} parent=1 // loop_body
      %v154 = vstv %s149
      %vm155 = vcmp.eq.s32.totalorder %v23, %v154
      %vm156 = vcmp.eq.s32.totalorder %v24, %v154
      %v157 = vsel %vm155, 1, 0
      %v158 = vsel %vm156, 1, 0
      %159 = vset.pattern.permute.xlu0 0
      %160 = vperm.xlu0 %159, %v157
      %v161 = vpop.permute.xlu0 %160
      %162 = vset.pattern.permute.xlu0 0
      %163 = vperm.xlu0 %162, %v158
      %v164 = vpop.permute.xlu0 %163
      %vm165 = vcmp.eq.s32.totalorder %v161, 1
      %vm166 = vcmp.eq.s32.totalorder %v164, 1
      %v167 = vsel %vm165, %v21, -inf
      %v168 = vsel %vm166, %v22, -inf
      %v169 = vmax.f32 %v167, %v168
      %v170 = vrot.slane %v169, 4
      %v171 = vmax.f32 %v169, %v170
      %v172 = vrot.slane %v171, 2
      %v173 = vmax.f32 %v171, %v172
      %v174 = vrot.slane %v173, 1
      %v175 = vmax.f32 %v173, %v174
      %s176 = scalar_lea.vmem [#allocation3], %s149
      %v177 = vld [vmem:[%s176] sm:$0x1]
      %v178 = vmax.f32 %v177, %v175
      %179 = vst [vmem:[%s176] sm:$0x1] %v178
    $region18: #{tpu_custom_call.1} parent=1 // loop_footer
      %s153 = sadd.s32 1, %s149
    $region19: #{tpu_custom_call.1} parent=1 // loop_footer_branch
      %148 = sbr.rel target = $region15
    $region20: #{tpu_custom_call.1} parent=1 // loop_exit
      _
    // Predicated region
    $region21: #{tpu_custom_call.1} parent=1 // pred_check
      %p180 = pneg %p15
    $region22: #{tpu_custom_call.1} parent=1 // pred_check_branch
      %182 = sbr.rel (%p180) target = $region24
    $region23: #{tpu_custom_call.1} parent=1 // pred_region
      %v183 = vld [vmem:[#allocation2] sm:$0xff]
      %v184 = vld [vmem:[#allocation3] sm:$0xff]
      %vm185 = vcmp.eq.f32.partialorder %v184, -inf
      %v186 = vsel %vm185, 0.0, %v184
      %187 = vst [vmem:[#allocation4] sm:$0xff] %v183
      %188 = vst [vmem:[#allocation6] sm:$0xff] %v186
    $region24: #{tpu_custom_call.1} parent=1 // pred_fallthru
      _
    // Predicated region
    $region25: #{tpu_custom_call.1} parent=1 // pred_check
      _
    $region26: #{tpu_custom_call.1} parent=1 // pred_check_branch
      %190 = sbr.rel (0) target = $region28
    $region27: #{tpu_custom_call.1} parent=1 // pred_region
      %s192 = ssub.s32 128, 128
      %193 = vsyncadd [#allocation5], %s192
      %s195 = sshll.u32 [#allocation4], 4
      %s196 = int_to_ptr.vmem [resolvable:$true] %s195
      %198 = dma.vmem_to_hbm [thread:$0]  %s196, 128, %s2, [#allocation5]
    $region28: #{tpu_custom_call.1} parent=1 // pred_fallthru
      _
    // Predicated region
    $region29: #{tpu_custom_call.1} parent=1 // pred_check
      _
    $region30: #{tpu_custom_call.1} parent=1 // pred_check_branch
      %200 = sbr.rel (0) target = $region32
    $region31: #{tpu_custom_call.1} parent=1 // pred_region
      %s202 = ssub.s32 128, 128
      %203 = vsyncadd [#allocation7], %s202
      %s205 = sshll.u32 [#allocation6], 4
      %s206 = int_to_ptr.vmem [resolvable:$true] %s205
      %208 = dma.vmem_to_hbm [thread:$0]  %s206, 128, %s3, [#allocation7]
    $region32: #{tpu_custom_call.1} parent=1 // pred_fallthru
      _
    // Predicated region
    $region33: #{tpu_custom_call.1} parent=1 // pred_check
      _
    $region34: #{tpu_custom_call.1} parent=1 // pred_check_branch
      %210 = sbr.rel (0) target = $region36
    $region35: #{tpu_custom_call.1} parent=1 // pred_region
      %211 = dma.done [#allocation5], 128
    $region36: #{tpu_custom_call.1} parent=1 // pred_fallthru
      _
    // Predicated region
    $region37: #{tpu_custom_call.1} parent=1 // pred_check
      _
    $region38: #{tpu_custom_call.1} parent=1 // pred_check_branch
      %213 = sbr.rel (0) target = $region40
    $region39: #{tpu_custom_call.1} parent=1 // pred_region
      %214 = dma.done [#allocation7], 128
    $region40: #{tpu_custom_call.1} parent=1 // pred_fallthru
      _
    %215 = vsyncpa [#allocation5], 1
    %216 = vsyncpa [#allocation7], 1

</llo_original>
